<compile_context>
chip_gen: v5e
topology: v5e:2x2
jax: 0.10.0
libtpu: 0.0.40
codegen_flags: <defaults>
</compile_context>

<pallas_src>
import functools

import jax
import jax.numpy as jnp
from jax.experimental import pallas as pl
from jax.experimental.pallas import tpu as pltpu

N_DIM = 16
N_LAYER = 3
LANE = 128
PACK = LANE // N_DIM            # 8 batch samples per 128-lane row
SUBLANE = 8


def _round_up(x: int, m: int) -> int:
    return ((x + m - 1) // m) * m


def noise_mlp_kernel(x_ref, w_ref, b_ref, o_ref):
    """Applies n_layer (Linear + LeakyReLU(0.2)) layers on a packed tile.

    x_ref: (TR, 128)      8 batch samples packed per row (lane = s*16 + d_in)
    w_ref: (L, 128, 128)  block-diagonal kron(I_8, W^T) per layer (resident)
    b_ref: (L, 1, 128)    bias tiled 8x along lanes (resident)
    o_ref: (TR, 128)      output tile, full-lane unmasked stores
    """
    x = x_ref[...]
    for l in range(w_ref.shape[0]):                  # static, unrolled (L=3)
        y = jnp.dot(x, w_ref[l], preferred_element_type=jnp.float32) + b_ref[l]
        # LeakyReLU(negative_slope=0.2)
        x = jnp.where(y > 0, y, 0.2 * y)
    o_ref[...] = x.astype(o_ref.dtype)


@functools.partial(jax.jit, static_argnames=("block_rows",))
def noise_mlp(z, weights, biases, *, block_rows=8192):
    """z: (B, D=16) f32.  weights: (L, D, D) PyTorch layout.  biases: (L, D).

    block_rows: packed rows per grid step (rows * 512 B per f32 block).
      8192  -> 4 MiB blocks (good default; fits v7x 64 MiB VMEM comfortably)
      16384 -> 8 MiB blocks (v6e / v5e with plenty of physical VMEM)
    """
    B, D = z.shape
    L = weights.shape[0]
    assert D == N_DIM and LANE % D == 0

    # ---- Packed-row geometry: 8 samples per 128-lane row -------------------
    rows_needed = pl.cdiv(B, PACK)
    tile_rows = min(block_rows, _round_up(rows_needed, SUBLANE))
    tile_rows = _round_up(tile_rows, SUBLANE)
    rows_padded = _round_up(rows_needed, tile_rows)
    Bp = rows_padded * PACK
    grid = (rows_padded // tile_rows,)

    # ---- Zero-copy repack (only a contiguous tail pad for ragged B) --------
    if Bp != B:
        z = jnp.pad(z, ((0, Bp - B), (0, 0)))        # contiguous tail append
    x_packed = z.reshape(rows_padded, LANE)          # free reshape

    # ---- Block-diagonal weights: kron(I_8, W^T), built once (64 KiB/layer) --
    w_t = jnp.transpose(weights, (0, 2, 1))          # (L, D_in, D_out) = W^T
    eye = jnp.eye(PACK, dtype=weights.dtype)
    w_blk = jnp.einsum("ab,lio->laibo", eye, w_t).reshape(L, LANE, LANE)
    b_tiled = jnp.tile(biases, (1, PACK)).reshape(L, 1, LANE)

    # ---- VMEM budget: double-buffered in+out blocks + resident weights ------
    act_block_bytes = tile_rows * LANE * 4
    vmem_limit = int(min(max(32 << 20, 4 * act_block_bytes + (4 << 20)),
                         112 << 20))

    # Advisory cost estimate: this call is memory-bound (~2 passes over acts).
    cost = pl.CostEstimate(
        flops=2 * L * rows_padded * LANE * LANE,
        transcendentals=0,
        bytes_accessed=2 * rows_padded * LANE * 4 + L * (LANE * LANE + LANE) * 4,
    )

    out_packed = pl.pallas_call(
        noise_mlp_kernel,
        out_shape=jax.ShapeDtypeStruct((rows_padded, LANE), z.dtype),
        grid=grid,
        in_specs=[
            # Activations: one (tile_rows, 128) block per step, pipelined.
            pl.BlockSpec((tile_rows, LANE), lambda i: (i, 0)),
            # Weights/biases: constant block index -> DMA'd once, resident.
            pl.BlockSpec((L, LANE, LANE), lambda i: (0, 0, 0)),
            pl.BlockSpec((L, 1, LANE), lambda i: (0, 0, 0)),
        ],
        out_specs=pl.BlockSpec((tile_rows, LANE), lambda i: (i, 0)),
        compiler_params=pltpu.CompilerParams(
            dimension_semantics=("parallel",),       # 2-TC sharding on v7x
            vmem_limit_bytes=vmem_limit,
        ),
        cost_estimate=cost,
    )(x_packed, w_blk, b_tiled)

    return out_packed.reshape(Bp, D)[:B]             # free reshape + slice


def init_params(key, n_dim=N_DIM, n_layer=N_LAYER):
    """nn.Linear default init: U(-1/sqrt(fan_in), 1/sqrt(fan_in))."""
    bound = 1.0 / (n_dim ** 0.5)
    kw, kb = jax.random.split(key)
    weights = jax.random.uniform(
        kw, (n_layer, n_dim, n_dim), jnp.float32, minval=-bound, maxval=bound)
    biases = jax.random.uniform(
        kb, (n_layer, n_dim), jnp.float32, minval=-bound, maxval=bound)
    return weights, biases


def reference(z, weights, biases):
    """Pure-JAX reference of the PyTorch forward (row-major x @ W.T + b)."""
    x = z
    for l in range(weights.shape[0]):
        y = x @ weights[l].T + biases[l]
        x = jnp.where(y > 0, y, 0.2 * y)
    return x


if __name__ == "__main__":
    key = jax.random.PRNGKey(0)
    kz, kz2, kp = jax.random.split(key, 3)

    weights, biases = init_params(kp)

    # Small demo batch (single grid step after packing/padding).
    B = 8
    z = jax.random.normal(kz, (B, N_DIM), dtype=jnp.float32)
    out = jax.block_until_ready(noise_mlp(z, weights, biases))
    ref = reference(z, weights, biases)
    assert out.shape == (B, N_DIM)
    assert jnp.allclose(out, ref, atol=1e-5, rtol=1e-5), "mismatch vs reference (B=8)"

    # Non-divisible batch with a tiny row tile to exercise the multi-step grid
    # and the tail-pad/slice path (300 samples -> 38 rows -> 3 blocks of 16).
    B2 = 300
    z2 = jax.random.normal(kz2, (B2, N_DIM), dtype=jnp.float32)
    out2 = jax.block_until_ready(noise_mlp(z2, weights, biases, block_rows=16))
    ref2 = reference(z2, weights, biases)
    assert out2.shape == (B2, N_DIM)
    assert jnp.allclose(out2, ref2, atol=1e-5, rtol=1e-5), "mismatch vs reference (B=300)"

    print("KERNEL_OK")
</pallas_src>

<mosaic_0001>
module attributes {stable_mosaic.version = 11 : i64} {
  func.func @noise_mlp_kernel(%arg0: i32, %arg1: memref<8x128xf32, #tpu.memory_space<vmem>>, %arg2: memref<3x128x128xf32, #tpu.memory_space<vmem>>, %arg3: memref<3x1x128xf32, #tpu.memory_space<vmem>>, %arg4: memref<8x128xf32, #tpu.memory_space<vmem>>) attributes {dimension_semantics = [#tpu.dimension_semantics<parallel>], iteration_bounds = array<i64: 1>, scalar_prefetch = 0 : i64, scratch_operands = 0 : i64, tpu.core_type = #tpu.core_type<tc>, window_params = [{transform_indices = @transform_0, window_bounds = array<i64: 8, 128>}, {pipeline_mode = #tpu.pipeline_mode<synchronous>, transform_indices = @transform_1, window_bounds = array<i64: 3, 128, 128>}, {pipeline_mode = #tpu.pipeline_mode<synchronous>, transform_indices = @transform_2, window_bounds = array<i64: 3, 1, 128>}, {transform_indices = @transform_3, window_bounds = array<i64: 8, 128>}]} {
    %c0 = arith.constant 0 : index
    %c0_0 = arith.constant 0 : index
    %0 = vector.load %arg1[%c0, %c0_0] : memref<8x128xf32, #tpu.memory_space<vmem>>, vector<8x128xf32>
    %c0_1 = arith.constant 0 : index
    %c0_2 = arith.constant 0 : index
    %c0_3 = arith.constant 0 : index
    %1 = vector.load %arg2[%c0_1, %c0_2, %c0_3] : memref<3x128x128xf32, #tpu.memory_space<vmem>>, vector<1x128x128xf32>
    %2 = vector.shape_cast %1 : vector<1x128x128xf32> to vector<128x128xf32>
    %cst = arith.constant dense<0.000000e+00> : vector<8x128xf32>
    %3 = tpu.matmul %0, %2, %cst {dimension_numbers = #tpu.dot_dimension_numbers<[1], [0], [0], [1], [0, 0, 1, 1], [], []>} : vector<8x128xf32>, vector<128x128xf32>, vector<8x128xf32> -> vector<8x128xf32>
    %c0_4 = arith.constant 0 : index
    %c0_5 = arith.constant 0 : index
    %c0_6 = arith.constant 0 : index
    %4 = vector.load %arg3[%c0_4, %c0_5, %c0_6] : memref<3x1x128xf32, #tpu.memory_space<vmem>>, vector<1x1x128xf32>
    %5 = vector.shape_cast %4 : vector<1x1x128xf32> to vector<1x128xf32>
    %6 = vector.broadcast %5 : vector<1x128xf32> to vector<8x128xf32>
    %7 = arith.addf %3, %6 : vector<8x128xf32>
    %cst_7 = arith.constant 0.000000e+00 : f32
    %8 = vector.broadcast %cst_7 : f32 to vector<8x128xf32>
    %9 = arith.cmpf ogt, %7, %8 : vector<8x128xf32>
    %cst_8 = arith.constant 2.000000e-01 : f32
    %10 = vector.broadcast %cst_8 : f32 to vector<8x128xf32>
    %11 = arith.mulf %10, %7 : vector<8x128xf32>
    %12 = arith.select %9, %7, %11 : vector<8x128xi1>, vector<8x128xf32>
    %c1 = arith.constant 1 : index
    %c0_9 = arith.constant 0 : index
    %c0_10 = arith.constant 0 : index
    %13 = vector.load %arg2[%c1, %c0_9, %c0_10] : memref<3x128x128xf32, #tpu.memory_space<vmem>>, vector<1x128x128xf32>
    %14 = vector.shape_cast %13 : vector<1x128x128xf32> to vector<128x128xf32>
    %cst_11 = arith.constant dense<0.000000e+00> : vector<8x128xf32>
    %15 = tpu.matmul %12, %14, %cst_11 {dimension_numbers = #tpu.dot_dimension_numbers<[1], [0], [0], [1], [0, 0, 1, 1], [], []>} : vector<8x128xf32>, vector<128x128xf32>, vector<8x128xf32> -> vector<8x128xf32>
    %c1_12 = arith.constant 1 : index
    %c0_13 = arith.constant 0 : index
    %c0_14 = arith.constant 0 : index
    %16 = vector.load %arg3[%c1_12, %c0_13, %c0_14] : memref<3x1x128xf32, #tpu.memory_space<vmem>>, vector<1x1x128xf32>
    %17 = vector.shape_cast %16 : vector<1x1x128xf32> to vector<1x128xf32>
    %18 = vector.broadcast %17 : vector<1x128xf32> to vector<8x128xf32>
    %19 = arith.addf %15, %18 : vector<8x128xf32>
    %cst_15 = arith.constant 0.000000e+00 : f32
    %20 = vector.broadcast %cst_15 : f32 to vector<8x128xf32>
    %21 = arith.cmpf ogt, %19, %20 : vector<8x128xf32>
    %cst_16 = arith.constant 2.000000e-01 : f32
    %22 = vector.broadcast %cst_16 : f32 to vector<8x128xf32>
    %23 = arith.mulf %22, %19 : vector<8x128xf32>
    %24 = arith.select %21, %19, %23 : vector<8x128xi1>, vector<8x128xf32>
    %c2 = arith.constant 2 : index
    %c0_17 = arith.constant 0 : index
    %c0_18 = arith.constant 0 : index
    %25 = vector.load %arg2[%c2, %c0_17, %c0_18] : memref<3x128x128xf32, #tpu.memory_space<vmem>>, vector<1x128x128xf32>
    %26 = vector.shape_cast %25 : vector<1x128x128xf32> to vector<128x128xf32>
    %cst_19 = arith.constant dense<0.000000e+00> : vector<8x128xf32>
    %27 = tpu.matmul %24, %26, %cst_19 {dimension_numbers = #tpu.dot_dimension_numbers<[1], [0], [0], [1], [0, 0, 1, 1], [], []>} : vector<8x128xf32>, vector<128x128xf32>, vector<8x128xf32> -> vector<8x128xf32>
    %c2_20 = arith.constant 2 : index
    %c0_21 = arith.constant 0 : index
    %c0_22 = arith.constant 0 : index
    %28 = vector.load %arg3[%c2_20, %c0_21, %c0_22] : memref<3x1x128xf32, #tpu.memory_space<vmem>>, vector<1x1x128xf32>
    %29 = vector.shape_cast %28 : vector<1x1x128xf32> to vector<1x128xf32>
    %30 = vector.broadcast %29 : vector<1x128xf32> to vector<8x128xf32>
    %31 = arith.addf %27, %30 : vector<8x128xf32>
    %cst_23 = arith.constant 0.000000e+00 : f32
    %32 = vector.broadcast %cst_23 : f32 to vector<8x128xf32>
    %33 = arith.cmpf ogt, %31, %32 : vector<8x128xf32>
    %cst_24 = arith.constant 2.000000e-01 : f32
    %34 = vector.broadcast %cst_24 : f32 to vector<8x128xf32>
    %35 = arith.mulf %34, %31 : vector<8x128xf32>
    %36 = arith.select %33, %31, %35 : vector<8x128xi1>, vector<8x128xf32>
    %c0_25 = arith.constant 0 : index
    %c0_26 = arith.constant 0 : index
    %37 = vector.load %arg4[%c0_25, %c0_26] : memref<8x128xf32, #tpu.memory_space<vmem>>, vector<8x128xf32>
    tpu.vector_store %arg4[%c0_25, %c0_26], %36 {strides = array<i32>} : memref<8x128xf32, #tpu.memory_space<vmem>>, vector<8x128xf32>,
    return
  }
  func.func @transform_0(%arg0: i32) -> (i32, i32) {
    %c0_i32 = arith.constant 0 : i32
    %c0_i32_0 = arith.constant 0 : i32
    return %arg0, %c0_i32 : i32, i32
  }
  func.func @transform_1(%arg0: i32) -> (i32, i32, i32) {
    %c0_i32 = arith.constant 0 : i32
    %c0_i32_0 = arith.constant 0 : i32
    %c0_i32_1 = arith.constant 0 : i32
    %c0_i32_2 = arith.constant 0 : i32
    return %c0_i32, %c0_i32_0, %c0_i32_1 : i32, i32, i32
  }
  func.func @transform_2(%arg0: i32) -> (i32, i32, i32) {
    %c0_i32 = arith.constant 0 : i32
    %c0_i32_0 = arith.constant 0 : i32
    %c0_i32_1 = arith.constant 0 : i32
    %c0_i32_2 = arith.constant 0 : i32
    return %c0_i32, %c0_i32_0, %c0_i32_1 : i32, i32, i32
  }
  func.func @transform_3(%arg0: i32) -> (i32, i32) {
    %c0_i32 = arith.constant 0 : i32
    %c0_i32_0 = arith.constant 0 : i32
    return %arg0, %c0_i32 : i32, i32
  }
}

</mosaic_0001>

<llo_original>
// kernel: noise_mlp.1
$region0: #{noise_mlp.1}
  #allocation0 [shape = 'u32[]', space=smem, size = 0x4, offset = 0x4, fixed_abs, tag = 'smem constant byte address 0x4 - core index']
  #allocation1 [shape = 'u32[72,128]{1,0:T(1,128)}', space=vmem, size = 0x9000, scoped, tag = 'internal scratch']
  %s0 = inlined_call_operand.vmem [shape: f32[8,128], index: 0, kind: input, shape index: {}]
  %s1 = inlined_call_operand.vmem [shape: f32[3,128,128], index: 1, kind: input, shape index: {}]
  %s2 = inlined_call_operand.vmem [shape: f32[3,1,128], index: 2, kind: input, shape index: {}]
  %s3 = inlined_call_operand.vmem [shape: f32[8,128], index: 3, kind: output, shape index: {}]
  %s4 = sld [smem:[#allocation0]]
  $region22: #{noise_mlp.1} parent=0
    _
  %s6 = ssub.s32 1, %s4
  %s7 = scalar_select 0, %s6, %s4
  // Predicated region
  $region2: #{noise_mlp.1} parent=0 // pred_check
    _
  $region3: #{noise_mlp.1} parent=0 // pred_check_branch
    %9 = sbr.rel (0) target = $region5
  $region4: #{noise_mlp.1} parent=0 // pred_region
    _
  $region5: #{noise_mlp.1} parent=0 // pred_fallthru
    _
  // Predicated region
  $region6: #{noise_mlp.1} parent=0 // pred_check
    _
  $region7: #{noise_mlp.1} parent=0 // pred_check_branch
    %11 = sbr.rel (0) target = $region9
  $region8: #{noise_mlp.1} parent=0 // pred_region
    _
  $region9: #{noise_mlp.1} parent=0 // pred_fallthru
    _
  // Predicated region
  $region10: #{noise_mlp.1} parent=0 // pred_check
    _
  $region11: #{noise_mlp.1} parent=0 // pred_check_branch
    %13 = sbr.rel (0) target = $region13
  $region12: #{noise_mlp.1} parent=0 // pred_region
    _
  $region13: #{noise_mlp.1} parent=0 // pred_fallthru
    _
  %v14 = vld [vmem:[%s0] sm:$0xff]
  %v15 = vld [vmem:[%s1] sm:$0xff]
  %v16 = vld [vmem:[%s1 + $0x8] sm:$0xff]
  %v17 = vld [vmem:[%s1 + $0x10] sm:$0xff]
  %v18 = vld [vmem:[%s1 + $0x18] sm:$0xff]
  %v19 = vld [vmem:[%s1 + $0x20] sm:$0xff]
  %v20 = vld [vmem:[%s1 + $0x28] sm:$0xff]
  %v21 = vld [vmem:[%s1 + $0x30] sm:$0xff]
  %v22 = vld [vmem:[%s1 + $0x38] sm:$0xff]
  %v23 = vld [vmem:[%s1 + $0x40] sm:$0xff]
  %v24 = vld [vmem:[%s1 + $0x48] sm:$0xff]
  %v25 = vld [vmem:[%s1 + $0x50] sm:$0xff]
  %v26 = vld [vmem:[%s1 + $0x58] sm:$0xff]
  %v27 = vld [vmem:[%s1 + $0x60] sm:$0xff]
  %v28 = vld [vmem:[%s1 + $0x68] sm:$0xff]
  %v29 = vld [vmem:[%s1 + $0x70] sm:$0xff]
  %v30 = vld [vmem:[%s1 + $0x78] sm:$0xff]
  %v31 = vld [vmem:[%s2] sm:$0x1]
  %v33 = vperm.slane %v31, 0
  %35 = vmatpush.msra.mxu0 %v30
  %36 = vmatpush.msra.mxu0 %v29
  %37 = vmatpush.msra.mxu0 %v28
  %38 = vmatpush.msra.mxu0 %v27
  %39 = vmatpush.msra.mxu0 %v26
  %40 = vmatpush.msra.mxu0 %v25
  %41 = vmatpush.msra.mxu0 %v24
  %42 = vmatpush.msra.mxu0 %v23
  %43 = vmatpush.msra.mxu0 %v22
  %44 = vmatpush.msra.mxu0 %v21
  %45 = vmatpush.msra.mxu0 %v20
  %46 = vmatpush.msra.mxu0 %v19
  %47 = vmatpush.msra.mxu0 %v18
  %48 = vmatpush.msra.mxu0 %v17
  %49 = vmatpush.msra.mxu0 %v16
  %50 = vmatpush.msra.mxu0 %v15
  %51 = vmatmul.f32.gmra.mxu0 %v14
  %v52 = vpop.f32.mrf.mxu0
  %v53 = vadd.f32 %v33, %v52
  %54 = vdwg.mxu0
  %vm55 = vcmp.gt.f32.partialorder %v53, 0.0
  %v56 = vmul.f32 %v53, 0.2
  %v57 = vsel %vm55, %v53, %v56
  %s58 = scalar_lea.vmem %s1, 128
  %v59 = vld [vmem:[%s58] sm:$0xff]
  %v60 = vld [vmem:[%s58 + $0x8] sm:$0xff]
  %v61 = vld [vmem:[%s58 + $0x10] sm:$0xff]
  %v62 = vld [vmem:[%s58 + $0x18] sm:$0xff]
  %v63 = vld [vmem:[%s58 + $0x20] sm:$0xff]
  %v64 = vld [vmem:[%s58 + $0x28] sm:$0xff]
  %v65 = vld [vmem:[%s58 + $0x30] sm:$0xff]
  %v66 = vld [vmem:[%s58 + $0x38] sm:$0xff]
  %v67 = vld [vmem:[%s58 + $0x40] sm:$0xff]
  %v68 = vld [vmem:[%s58 + $0x48] sm:$0xff]
  %v69 = vld [vmem:[%s58 + $0x50] sm:$0xff]
  %v70 = vld [vmem:[%s58 + $0x58] sm:$0xff]
  %v71 = vld [vmem:[%s58 + $0x60] sm:$0xff]
  %v72 = vld [vmem:[%s58 + $0x68] sm:$0xff]
  %v73 = vld [vmem:[%s58 + $0x70] sm:$0xff]
  %v74 = vld [vmem:[%s58 + $0x78] sm:$0xff]
  %s75 = scalar_lea.vmem %s2, 1
  %v76 = vld [vmem:[%s75] sm:$0x1]
  %v78 = vperm.slane %v76, 0
  %80 = vmatpush.msra.mxu0 %v74
  %81 = vmatpush.msra.mxu0 %v73
  %82 = vmatpush.msra.mxu0 %v72
  %83 = vmatpush.msra.mxu0 %v71
  %84 = vmatpush.msra.mxu0 %v70
  %85 = vmatpush.msra.mxu0 %v69
  %86 = vmatpush.msra.mxu0 %v68
  %87 = vmatpush.msra.mxu0 %v67
  %88 = vmatpush.msra.mxu0 %v66
  %89 = vmatpush.msra.mxu0 %v65
  %90 = vmatpush.msra.mxu0 %v64
  %91 = vmatpush.msra.mxu0 %v63
  %92 = vmatpush.msra.mxu0 %v62
  %93 = vmatpush.msra.mxu0 %v61
  %94 = vmatpush.msra.mxu0 %v60
  %95 = vmatpush.msra.mxu0 %v59
  %96 = vmatmul.f32.gmra.mxu0 %v57
  %v97 = vpop.f32.mrf.mxu0
  %v98 = vadd.f32 %v78, %v97
  %99 = vdwg.mxu0
  %vm100 = vcmp.gt.f32.partialorder %v98, 0.0
  %v101 = vmul.f32 %v98, 0.2
  %v102 = vsel %vm100, %v98, %v101
  %s103 = scalar_lea.vmem %s1, 256
  %v104 = vld [vmem:[%s103] sm:$0xff]
  %v105 = vld [vmem:[%s103 + $0x8] sm:$0xff]
  %v106 = vld [vmem:[%s103 + $0x10] sm:$0xff]
  %v107 = vld [vmem:[%s103 + $0x18] sm:$0xff]
  %v108 = vld [vmem:[%s103 + $0x20] sm:$0xff]
  %v109 = vld [vmem:[%s103 + $0x28] sm:$0xff]
  %v110 = vld [vmem:[%s103 + $0x30] sm:$0xff]
  %v111 = vld [vmem:[%s103 + $0x38] sm:$0xff]
  %v112 = vld [vmem:[%s103 + $0x40] sm:$0xff]
  %v113 = vld [vmem:[%s103 + $0x48] sm:$0xff]
  %v114 = vld [vmem:[%s103 + $0x50] sm:$0xff]
  %v115 = vld [vmem:[%s103 + $0x58] sm:$0xff]
  %v116 = vld [vmem:[%s103 + $0x60] sm:$0xff]
  %v117 = vld [vmem:[%s103 + $0x68] sm:$0xff]
  %v118 = vld [vmem:[%s103 + $0x70] sm:$0xff]
  %v119 = vld [vmem:[%s103 + $0x78] sm:$0xff]
  %s120 = scalar_lea.vmem %s2, 2
  %v121 = vld [vmem:[%s120] sm:$0x1]
  %v123 = vperm.slane %v121, 0
  %125 = vmatpush.msra.mxu0 %v119
  %126 = vmatpush.msra.mxu0 %v118
  %127 = vmatpush.msra.mxu0 %v117
  %128 = vmatpush.msra.mxu0 %v116
  %129 = vmatpush.msra.mxu0 %v115
  %130 = vmatpush.msra.mxu0 %v114
  %131 = vmatpush.msra.mxu0 %v113
  %132 = vmatpush.msra.mxu0 %v112
  %133 = vmatpush.msra.mxu0 %v111
  %134 = vmatpush.msra.mxu0 %v110
  %135 = vmatpush.msra.mxu0 %v109
  %136 = vmatpush.msra.mxu0 %v108
  %137 = vmatpush.msra.mxu0 %v107
  %138 = vmatpush.msra.mxu0 %v106
  %139 = vmatpush.msra.mxu0 %v105
  %140 = vmatpush.msra.mxu0 %v104
  %141 = vmatmul.f32.gmra.mxu0 %v102
  %v142 = vpop.f32.mrf.mxu0
  %v143 = vadd.f32 %v123, %v142
  %144 = vdwg.mxu0
  %vm145 = vcmp.gt.f32.partialorder %v143, 0.0
  %v146 = vmul.f32 %v143, 0.2
  %v147 = vsel %vm145, %v143, %v146
  %148 = vst [vmem:[%s3] sm:$0xff] %v147
  // Predicated region
  $region14: #{noise_mlp.1} parent=0 // pred_check
    _
  $region15: #{noise_mlp.1} parent=0 // pred_check_branch
    %150 = sbr.rel (0) target = $region17
  $region16: #{noise_mlp.1} parent=0 // pred_region
    _
  $region17: #{noise_mlp.1} parent=0 // pred_fallthru
    _
  // Predicated region
  $region18: #{noise_mlp.1} parent=0 // pred_check
    _
  $region19: #{noise_mlp.1} parent=0 // pred_check_branch
    %152 = sbr.rel (0) target = $region21
  $region20: #{noise_mlp.1} parent=0 // pred_region
    _
  $region21: #{noise_mlp.1} parent=0 // pred_fallthru
    _

</llo_original>
